<compile_context>
chip_gen: v5e
topology: v5e:2x2
jax: 0.10.0
libtpu: 0.0.40
codegen_flags: <defaults>
</compile_context>

<pallas_src>
import jax
import jax.numpy as jnp
from jax.experimental import pallas as pl
from jax.experimental.pallas import tpu as pltpu


def _double_q_kernel(a_ref, s_ref, w1_ref, w2_ref, w3_ref, b_ref, o_ref):
    """Fused double-Q MLP + elementwise min, all in VMEM.

    a_ref:  (bm, A)      action tile
    s_ref:  (bm, S)      state tile
    w1_ref: (A+S, 2H)    [w1a | w1b]
    w2_ref: (2H, 2H)     blockdiag(w2a, w2b)
    w3_ref: (2, 2H)      row 0 = [w3a, 0], row 1 = [0, w3b]
    b_ref:  (3, 2H)      row 0 = [b1a|b1b], row 1 = [b2a|b2b], row 2 = [b3a, b3b, 0...]
    o_ref:  (bm, 128)    lane-dense output, min(q1,q2) broadcast across lanes
    """
    A = a_ref.shape[-1]
    act = a_ref[...].astype(jnp.float32)
    st = s_ref[...].astype(jnp.float32)
    b = b_ref[...]                                    # (3, 2H)

    # Layer 1: split-K matmul replaces the external concat([action, state]).
    h = (jnp.dot(act, w1_ref[:A, :], preferred_element_type=jnp.float32)
         + jnp.dot(st, w1_ref[A:, :], preferred_element_type=jnp.float32)
         + b[0:1, :])
    h = jnp.maximum(h, 0.0)

    # Layer 2: one block-diagonal matmul keeps the two Q paths independent.
    h = jnp.dot(h, w2_ref[...], preferred_element_type=jnp.float32) + b[1:2, :]
    h = jnp.maximum(h, 0.0)

    # Layer 3: VPU multiply + lane reduce instead of an N=1 MXU pass.
    w3 = w3_ref[...]                                  # (2, 2H)
    q1 = jnp.sum(h * w3[0:1, :], axis=-1, keepdims=True) + b[2:3, 0:1]
    q2 = jnp.sum(h * w3[1:2, :], axis=-1, keepdims=True) + b[2:3, 1:2]
    q = jnp.minimum(q1, q2)                           # (bm, 1)

    # Lane-dense store; the wrapper slices column 0.
    o_ref[...] = jnp.broadcast_to(q, o_ref.shape).astype(o_ref.dtype)


_OUT_LANES = 128


def _pick_batch_tile(batch):
    # Weights + per-tile activations are tiny, so take the biggest tile that
    # evenly divides the batch (fewer grid steps -> less per-step overhead).
    for t in (1024, 512, 256, 128, 64, 32, 16, 8):
        if batch % t == 0:
            return t
    return batch


def gpg_critic_forward(action, state, packed):
    """GPGCritic.forward: q(action, state) = min(Q1(x), Q2(x)), x = [action, state]."""
    B, A = action.shape
    S = state.shape[-1]
    w1, w2, w3, bias = packed["w1"], packed["w2"], packed["w3"], packed["bias"]
    H2 = w1.shape[1]                                   # 2 * hidden

    bm = _pick_batch_tile(B)
    grid = (B // bm,)

    flops = 2 * B * ((A + S) * H2 + H2 * H2 + H2 * 2)
    bytes_accessed = 4 * (B * (A + S) + w1.size + w2.size + w3.size + bias.size
                          + B * _OUT_LANES)

    out = pl.pallas_call(
        _double_q_kernel,
        out_shape=jax.ShapeDtypeStruct((B, _OUT_LANES), jnp.float32),
        grid=grid,
        in_specs=[
            pl.BlockSpec((bm, A), lambda i: (i, 0)),       # action: streamed over batch
            pl.BlockSpec((bm, S), lambda i: (i, 0)),       # state:  streamed over batch
            pl.BlockSpec(w1.shape, lambda i: (0, 0)),      # weights stay resident
            pl.BlockSpec(w2.shape, lambda i: (0, 0)),
            pl.BlockSpec(w3.shape, lambda i: (0, 0)),
            pl.BlockSpec(bias.shape, lambda i: (0, 0)),
        ],
        out_specs=pl.BlockSpec((bm, _OUT_LANES), lambda i: (i, 0)),
        compiler_params=pltpu.CompilerParams(
            dimension_semantics=("parallel",)),
        cost_estimate=pl.CostEstimate(
            flops=int(flops), transcendentals=0,
            bytes_accessed=int(bytes_accessed)),
    )(action.astype(jnp.float32), state.astype(jnp.float32), w1, w2, w3, bias)

    return out[:, :1]


def init_params(key, in_dim, hidden):
    """Deterministic init of the two Q-network MLPs (weights stored as (in, out))."""
    ks = jax.random.split(key, 12)

    def linear(kw, kb, fan_in, fan_out):
        bound = 1.0 / jnp.sqrt(fan_in)
        w = jax.random.uniform(kw, (fan_in, fan_out), jnp.float32, -bound, bound)
        b = jax.random.uniform(kb, (1, fan_out), jnp.float32, -bound, bound)
        return w, b

    w1a, b1a = linear(ks[0], ks[1], in_dim, hidden)
    w2a, b2a = linear(ks[2], ks[3], hidden, hidden)
    w3a, b3a = linear(ks[4], ks[5], hidden, 1)
    w1b, b1b = linear(ks[6], ks[7], in_dim, hidden)
    w2b, b2b = linear(ks[8], ks[9], hidden, hidden)
    w3b, b3b = linear(ks[10], ks[11], hidden, 1)
    return dict(w1a=w1a, b1a=b1a, w2a=w2a, b2a=b2a, w3a=w3a, b3a=b3a,
                w1b=w1b, b1b=b1b, w2b=w2b, b2b=b2b, w3b=w3b, b3b=b3b)


def pack_params(p):
    """One-time packing of the two Q-MLPs into fused weight/bias slabs."""
    H = p["w1a"].shape[1]
    f32 = jnp.float32
    zHH = jnp.zeros((H, H), f32)
    zH = jnp.zeros((H,), f32)

    w1 = jnp.concatenate([p["w1a"], p["w1b"]], axis=1)                  # (D, 2H)
    w2 = jnp.concatenate(
        [jnp.concatenate([p["w2a"], zHH], axis=1),
         jnp.concatenate([zHH, p["w2b"]], axis=1)], axis=0)             # (2H, 2H)
    w3 = jnp.stack(
        [jnp.concatenate([p["w3a"][:, 0], zH]),
         jnp.concatenate([zH, p["w3b"][:, 0]])], axis=0)                # (2, 2H)

    b1_row = jnp.concatenate([p["b1a"][0], p["b1b"][0]])                # (2H,)
    b2_row = jnp.concatenate([p["b2a"][0], p["b2b"][0]])                # (2H,)
    b3_row = jnp.zeros((2 * H,), f32).at[0].set(p["b3a"][0, 0]).at[1].set(p["b3b"][0, 0])
    bias = jnp.stack([b1_row, b2_row, b3_row], axis=0)                  # (3, 2H)

    return dict(w1=w1, w2=w2, w3=w3, bias=bias)


def _reference(action, state, p):
    x = jnp.concatenate([action, state], axis=-1).astype(jnp.float32)

    def mlp(w1, b1, w2, b2, w3, b3):
        h = jnp.maximum(x @ w1 + b1, 0.0)
        h = jnp.maximum(h @ w2 + b2, 0.0)
        return h @ w3 + b3

    q1 = mlp(p["w1a"], p["b1a"], p["w2a"], p["b2a"], p["w3a"], p["b3a"])
    q2 = mlp(p["w1b"], p["b1b"], p["w2b"], p["b2b"], p["w3b"], p["b3b"])
    return jnp.minimum(q1, q2)


if __name__ == "__main__":
    key = jax.random.PRNGKey(0)
    k_act, k_state, k_param = jax.random.split(key, 3)

    batch = 8
    action_dim = 8
    state_dim = 16
    hidden = 32

    action = jax.random.normal(k_act, (batch, action_dim), jnp.float32)
    state = jax.random.normal(k_state, (batch, state_dim), jnp.float32)
    raw_params = init_params(k_param, action_dim + state_dim, hidden)
    packed = pack_params(raw_params)   # done once, outside the forward path

    q = gpg_critic_forward(action, state, packed)
    q = jax.block_until_ready(q)

    q_ref = _reference(action, state, raw_params)
    assert q.shape == (batch, 1), q.shape
    assert jnp.allclose(q, q_ref, atol=1e-5, rtol=1e-5), (q, q_ref)

    # TODO(synk): q_loss / compute_double_q paths (target network, softmax value
    # backup) are training-time utilities, not part of forward(); not kernelized.
    # TODO(synk): for large-batch training on v6e/v7x, cast activations/weights
    # to bf16 (keep f32 accumulation) for full MXU throughput.
    print("KERNEL_OK")
</pallas_src>

<mosaic_0001>
module attributes {stable_mosaic.version = 11 : i64} {
  func.func @_double_q_kernel(%arg0: i32, %arg1: memref<8x8xf32, #tpu.memory_space<vmem>>, %arg2: memref<8x16xf32, #tpu.memory_space<vmem>>, %arg3: memref<24x64xf32, #tpu.memory_space<vmem>>, %arg4: memref<64x64xf32, #tpu.memory_space<vmem>>, %arg5: memref<2x64xf32, #tpu.memory_space<vmem>>, %arg6: memref<3x64xf32, #tpu.memory_space<vmem>>, %arg7: memref<8x128xf32, #tpu.memory_space<vmem>>) attributes {dimension_semantics = [#tpu.dimension_semantics<parallel>], iteration_bounds = array<i64: 1>, scalar_prefetch = 0 : i64, scratch_operands = 0 : i64, tpu.core_type = #tpu.core_type<tc>, window_params = [{transform_indices = @transform_0, window_bounds = array<i64: 8, 8>}, {transform_indices = @transform_1, window_bounds = array<i64: 8, 16>}, {pipeline_mode = #tpu.pipeline_mode<synchronous>, transform_indices = @transform_2, window_bounds = array<i64: 24, 64>}, {pipeline_mode = #tpu.pipeline_mode<synchronous>, transform_indices = @transform_3, window_bounds = array<i64: 64, 64>}, {pipeline_mode = #tpu.pipeline_mode<synchronous>, transform_indices = @transform_4, window_bounds = array<i64: 2, 64>}, {pipeline_mode = #tpu.pipeline_mode<synchronous>, transform_indices = @transform_5, window_bounds = array<i64: 3, 64>}, {transform_indices = @transform_6, window_bounds = array<i64: 8, 128>}]} {
    %c0 = arith.constant 0 : index
    %c0_0 = arith.constant 0 : index
    %0 = vector.load %arg1[%c0, %c0_0] : memref<8x8xf32, #tpu.memory_space<vmem>>, vector<8x8xf32>
    %c0_1 = arith.constant 0 : index
    %c0_2 = arith.constant 0 : index
    %1 = vector.load %arg2[%c0_1, %c0_2] : memref<8x16xf32, #tpu.memory_space<vmem>>, vector<8x16xf32>
    %c0_3 = arith.constant 0 : index
    %c0_4 = arith.constant 0 : index
    %2 = vector.load %arg6[%c0_3, %c0_4] : memref<3x64xf32, #tpu.memory_space<vmem>>, vector<3x64xf32>
    %c0_5 = arith.constant 0 : index
    %c0_6 = arith.constant 0 : index
    %3 = vector.load %arg3[%c0_5, %c0_6] : memref<24x64xf32, #tpu.memory_space<vmem>>, vector<8x64xf32>
    %cst = arith.constant dense<0.000000e+00> : vector<8x64xf32>
    %4 = tpu.matmul %0, %3, %cst {dimension_numbers = #tpu.dot_dimension_numbers<[1], [0], [0], [1], [0, 0, 1, 1], [], []>} : vector<8x8xf32>, vector<8x64xf32>, vector<8x64xf32> -> vector<8x64xf32>
    %c8 = arith.constant 8 : index
    %c0_7 = arith.constant 0 : index
    %5 = vector.load %arg3[%c8, %c0_7] : memref<24x64xf32, #tpu.memory_space<vmem>>, vector<16x64xf32>
    %cst_8 = arith.constant dense<0.000000e+00> : vector<8x64xf32>
    %6 = tpu.matmul %1, %5, %cst_8 {dimension_numbers = #tpu.dot_dimension_numbers<[1], [0], [0], [1], [0, 0, 1, 1], [], []>} : vector<8x16xf32>, vector<16x64xf32>, vector<8x64xf32> -> vector<8x64xf32>
    %7 = arith.addf %4, %6 : vector<8x64xf32>
    %8 = vector.extract_strided_slice %2 {offsets = [0, 0], sizes = [1, 64], strides = [1, 1]} : vector<3x64xf32> to vector<1x64xf32>
    %9 = vector.broadcast %8 : vector<1x64xf32> to vector<8x64xf32>
    %10 = arith.addf %7, %9 : vector<8x64xf32>
    %cst_9 = arith.constant 0.000000e+00 : f32
    %11 = vector.broadcast %cst_9 : f32 to vector<8x64xf32>
    %12 = arith.maximumf %10, %11 : vector<8x64xf32>
    %c0_10 = arith.constant 0 : index
    %c0_11 = arith.constant 0 : index
    %13 = vector.load %arg4[%c0_10, %c0_11] : memref<64x64xf32, #tpu.memory_space<vmem>>, vector<64x64xf32>
    %cst_12 = arith.constant dense<0.000000e+00> : vector<8x64xf32>
    %14 = tpu.matmul %12, %13, %cst_12 {dimension_numbers = #tpu.dot_dimension_numbers<[1], [0], [0], [1], [0, 0, 1, 1], [], []>} : vector<8x64xf32>, vector<64x64xf32>, vector<8x64xf32> -> vector<8x64xf32>
    %15 = vector.extract_strided_slice %2 {offsets = [1, 0], sizes = [1, 64], strides = [1, 1]} : vector<3x64xf32> to vector<1x64xf32>
    %16 = vector.broadcast %15 : vector<1x64xf32> to vector<8x64xf32>
    %17 = arith.addf %14, %16 : vector<8x64xf32>
    %cst_13 = arith.constant 0.000000e+00 : f32
    %18 = vector.broadcast %cst_13 : f32 to vector<8x64xf32>
    %19 = arith.maximumf %17, %18 : vector<8x64xf32>
    %c0_14 = arith.constant 0 : index
    %c0_15 = arith.constant 0 : index
    %20 = vector.load %arg5[%c0_14, %c0_15] : memref<2x64xf32, #tpu.memory_space<vmem>>, vector<2x64xf32>
    %21 = vector.extract_strided_slice %20 {offsets = [0, 0], sizes = [1, 64], strides = [1, 1]} : vector<2x64xf32> to vector<1x64xf32>
    %22 = vector.broadcast %21 : vector<1x64xf32> to vector<8x64xf32>
    %23 = arith.mulf %19, %22 : vector<8x64xf32>
    %cst_16 = arith.constant dense<0.000000e+00> : vector<8xf32>
    %24 = vector.multi_reduction <add>, %23, %cst_16 [1] : vector<8x64xf32> to vector<8xf32>
    %25 = vector.shape_cast %24 : vector<8xf32> to vector<8x1xf32>
    %26 = vector.extract_strided_slice %2 {offsets = [2, 0], sizes = [1, 1], strides = [1, 1]} : vector<3x64xf32> to vector<1x1xf32>
    %27 = vector.broadcast %26 : vector<1x1xf32> to vector<8x1xf32>
    %28 = arith.addf %25, %27 : vector<8x1xf32>
    %29 = vector.extract_strided_slice %20 {offsets = [1, 0], sizes = [1, 64], strides = [1, 1]} : vector<2x64xf32> to vector<1x64xf32>
    %30 = vector.broadcast %29 : vector<1x64xf32> to vector<8x64xf32>
    %31 = arith.mulf %19, %30 : vector<8x64xf32>
    %cst_17 = arith.constant dense<0.000000e+00> : vector<8xf32>
    %32 = vector.multi_reduction <add>, %31, %cst_17 [1] : vector<8x64xf32> to vector<8xf32>
    %33 = vector.shape_cast %32 : vector<8xf32> to vector<8x1xf32>
    %34 = vector.extract_strided_slice %2 {offsets = [2, 1], sizes = [1, 1], strides = [1, 1]} : vector<3x64xf32> to vector<1x1xf32>
    %35 = vector.broadcast %34 : vector<1x1xf32> to vector<8x1xf32>
    %36 = arith.addf %33, %35 : vector<8x1xf32>
    %37 = arith.minimumf %28, %36 : vector<8x1xf32>
    %38 = vector.shape_cast %37 : vector<8x1xf32> to vector<8x1xf32>
    %39 = vector.broadcast %38 : vector<8x1xf32> to vector<8x128xf32>
    %c0_18 = arith.constant 0 : index
    %c0_19 = arith.constant 0 : index
    %40 = vector.load %arg7[%c0_18, %c0_19] : memref<8x128xf32, #tpu.memory_space<vmem>>, vector<8x128xf32>
    tpu.vector_store %arg7[%c0_18, %c0_19], %39 {strides = array<i32>} : memref<8x128xf32, #tpu.memory_space<vmem>>, vector<8x128xf32>,
    return
  }
  func.func @transform_0(%arg0: i32) -> (i32, i32) {
    %c0_i32 = arith.constant 0 : i32
    %c0_i32_0 = arith.constant 0 : i32
    return %arg0, %c0_i32 : i32, i32
  }
  func.func @transform_1(%arg0: i32) -> (i32, i32) {
    %c0_i32 = arith.constant 0 : i32
    %c0_i32_0 = arith.constant 0 : i32
    return %arg0, %c0_i32 : i32, i32
  }
  func.func @transform_2(%arg0: i32) -> (i32, i32) {
    %c0_i32 = arith.constant 0 : i32
    %c0_i32_0 = arith.constant 0 : i32
    %c0_i32_1 = arith.constant 0 : i32
    return %c0_i32, %c0_i32_0 : i32, i32
  }
  func.func @transform_3(%arg0: i32) -> (i32, i32) {
    %c0_i32 = arith.constant 0 : i32
    %c0_i32_0 = arith.constant 0 : i32
    %c0_i32_1 = arith.constant 0 : i32
    return %c0_i32, %c0_i32_0 : i32, i32
  }
  func.func @transform_4(%arg0: i32) -> (i32, i32) {
    %c0_i32 = arith.constant 0 : i32
    %c0_i32_0 = arith.constant 0 : i32
    %c0_i32_1 = arith.constant 0 : i32
    return %c0_i32, %c0_i32_0 : i32, i32
  }
  func.func @transform_5(%arg0: i32) -> (i32, i32) {
    %c0_i32 = arith.constant 0 : i32
    %c0_i32_0 = arith.constant 0 : i32
    %c0_i32_1 = arith.constant 0 : i32
    return %c0_i32, %c0_i32_0 : i32, i32
  }
  func.func @transform_6(%arg0: i32) -> (i32, i32) {
    %c0_i32 = arith.constant 0 : i32
    %c0_i32_0 = arith.constant 0 : i32
    return %arg0, %c0_i32 : i32, i32
  }
}

</mosaic_0001>

<llo_original>
// kernel: tpu_custom_call.1
$region0: #{tpu_custom_call.1}
  #allocation0 [shape = 'u32[]', space=smem, size = 0x4, offset = 0x4, fixed_abs, tag = 'smem constant byte address 0x4 - core index']
  #allocation1 [shape = 'u32[72,128]{1,0:T(1,128)}', space=vmem, size = 0x9000, scoped, tag = 'internal scratch']
  %s0 = inlined_call_operand.hbm [shape: f32[8,8], index: 0, kind: input, shape index: {}]
  %s1 = inlined_call_operand.hbm [shape: f32[8,16], index: 1, kind: input, shape index: {}]
  %s2 = inlined_call_operand.hbm [shape: f32[24,64], index: 2, kind: input, shape index: {}]
  %s3 = inlined_call_operand.hbm [shape: f32[64,64], index: 3, kind: input, shape index: {}]
  %s4 = inlined_call_operand.hbm [shape: f32[2,64], index: 4, kind: input, shape index: {}]
  %s5 = inlined_call_operand.vmem [shape: f32[3,64], index: 5, kind: input, shape index: {}]
  %s6 = inlined_call_operand.hbm [shape: f32[8,128], index: 6, kind: output, shape index: {}]
  %s7 = sld [smem:[#allocation0]]
  $region54: #{tpu_custom_call.1} parent=0
    _
  %s9 = ssub.s32 1, %s7
  %s10 = scalar_select 0, %s9, %s7
  $region1: #{tpu_custom_call.1} parent=0
    #allocation2 [shape = 'u8[4096]{0}', space=vmem, size = 0x1000, scoped, tag = 'input window, operand 0, single buffered']
    #allocation3 [shape = 's32[1]{0}', space=sflag, size = 0x4, scoped, tag = 'scoped memory for tpu_custom_call.1']
    #allocation4 [shape = 's32[1]{0}', space=sflag, size = 0x4, scoped, tag = 'scoped memory for tpu_custom_call.1']
    #allocation5 [shape = 'u8[4096]{0}', space=vmem, size = 0x1000, scoped, tag = 'input window, operand 1, single buffered']
    #allocation6 [shape = 's32[1]{0}', space=sflag, size = 0x4, scoped, tag = 'scoped memory for tpu_custom_call.1']
    #allocation7 [shape = 'u8[12288]{0}', space=vmem, size = 0x3000, scoped, tag = 'input window, operand 2, single buffered']
    #allocation8 [shape = 'u8[32768]{0}', space=vmem, size = 0x8000, scoped, tag = 'input window, operand 3, single buffered']
    #allocation9 [shape = 's32[1]{0}', space=sflag, size = 0x4, scoped, tag = 'scoped memory for tpu_custom_call.1']
    #allocation10 [shape = 'u8[1024]{0}', space=vmem, size = 0x400, scoped, tag = 'input window, operand 4, single buffered']
    #allocation11 [shape = 'u8[4096]{0}', space=vmem, size = 0x1000, scoped, tag = 'output window, operand 0, single buffered']
    %11 = vsyncpa [#allocation3], 0
    %12 = vsyncpa [#allocation6], 0
    %13 = vsyncpa [#allocation9], 0
    %14 = vsyncpa [#allocation4], 0
    // Predicated region
    $region2: #{tpu_custom_call.1} parent=1 // pred_check
      _
    $region3: #{tpu_custom_call.1} parent=1 // pred_check_branch
      %16 = sbr.rel (0) target = $region5
    $region4: #{tpu_custom_call.1} parent=1 // pred_region
      %18 = vsyncadd [#allocation3], 0
      %s20 = sshll.u32 %s0, 4
      %s21 = int_to_ptr.hbm [resolvable:$true] %s20
      %s22 = sshll.u32 [#allocation2], 4
      %s23 = int_to_ptr.vmem [resolvable:$true] %s22
      %25 = dma.hbm_to_vmem [thread:$0]  %s21, 128, %s23, [#allocation3]
    $region5: #{tpu_custom_call.1} parent=1 // pred_fallthru
      _
    // Predicated region
    $region6: #{tpu_custom_call.1} parent=1 // pred_check
      _
    $region7: #{tpu_custom_call.1} parent=1 // pred_check_branch
      %27 = sbr.rel (0) target = $region9
    $region8: #{tpu_custom_call.1} parent=1 // pred_region
      %29 = vsyncadd [#allocation6], 0
      %s31 = sshll.u32 %s1, 4
      %s32 = int_to_ptr.hbm [resolvable:$true] %s31
      %s33 = sshll.u32 [#allocation5], 4
      %s34 = int_to_ptr.vmem [resolvable:$true] %s33
      %36 = dma.hbm_to_vmem [thread:$0]  %s32, 128, %s34, [#allocation6]
    $region9: #{tpu_custom_call.1} parent=1 // pred_fallthru
      _
    // Predicated region
    $region10: #{tpu_custom_call.1} parent=1 // pred_check
      _
    $region11: #{tpu_custom_call.1} parent=1 // pred_check_branch
      %38 = sbr.rel (0) target = $region13
    $region12: #{tpu_custom_call.1} parent=1 // pred_region
      %40 = vsyncadd [#allocation6], 0
      %s41 = sshll.u32 %s2, 4
      %s42 = int_to_ptr.hbm [resolvable:$true] %s41
      %s43 = sshll.u32 [#allocation7], 4
      %s44 = int_to_ptr.vmem [resolvable:$true] %s43
      %49 = dma.hbm_to_vmem [thread:$0]  %s42, 384, %s44, [#allocation6], 128, 128, 8
    $region13: #{tpu_custom_call.1} parent=1 // pred_fallthru
      _
    // Predicated region
    $region14: #{tpu_custom_call.1} parent=1 // pred_check
      _
    $region15: #{tpu_custom_call.1} parent=1 // pred_check_branch
      %51 = sbr.rel (0) target = $region17
    $region16: #{tpu_custom_call.1} parent=1 // pred_region
      %53 = vsyncadd [#allocation9], 0
      %s54 = sshll.u32 %s3, 4
      %s55 = int_to_ptr.hbm [resolvable:$true] %s54
      %s56 = sshll.u32 [#allocation8], 4
      %s57 = int_to_ptr.vmem [resolvable:$true] %s56
      %62 = dma.hbm_to_vmem [thread:$0]  %s55, 1024, %s57, [#allocation9], 128, 128, 8
    $region17: #{tpu_custom_call.1} parent=1 // pred_fallthru
      _
    // Predicated region
    $region18: #{tpu_custom_call.1} parent=1 // pred_check
      _
    $region19: #{tpu_custom_call.1} parent=1 // pred_check_branch
      %64 = sbr.rel (0) target = $region21
    $region20: #{tpu_custom_call.1} parent=1 // pred_region
      %66 = vsyncadd [#allocation9], 0
      %s68 = sshll.u32 %s4, 4
      %s69 = int_to_ptr.hbm [resolvable:$true] %s68
      %s70 = sshll.u32 [#allocation10], 4
      %s71 = int_to_ptr.vmem [resolvable:$true] %s70
      %73 = dma.hbm_to_vmem [thread:$0]  %s69, 32, %s71, [#allocation9]
    $region21: #{tpu_custom_call.1} parent=1 // pred_fallthru
      _
    // Predicated region
    $region22: #{tpu_custom_call.1} parent=1 // pred_check
      _
    $region23: #{tpu_custom_call.1} parent=1 // pred_check_branch
      %75 = sbr.rel (0) target = $region25
    $region24: #{tpu_custom_call.1} parent=1 // pred_region
      _
    $region25: #{tpu_custom_call.1} parent=1 // pred_fallthru
      _
    // Predicated region
    $region26: #{tpu_custom_call.1} parent=1 // pred_check
      _
    $region27: #{tpu_custom_call.1} parent=1 // pred_check_branch
      %77 = sbr.rel (0) target = $region29
    $region28: #{tpu_custom_call.1} parent=1 // pred_region
      %79 = dma.done [#allocation3], 128
    $region29: #{tpu_custom_call.1} parent=1 // pred_fallthru
      _
    // Predicated region
    $region30: #{tpu_custom_call.1} parent=1 // pred_check
      _
    $region31: #{tpu_custom_call.1} parent=1 // pred_check_branch
      %81 = sbr.rel (0) target = $region33
    $region32: #{tpu_custom_call.1} parent=1 // pred_region
      %83 = dma.done [#allocation6], 128
    $region33: #{tpu_custom_call.1} parent=1 // pred_fallthru
      _
    // Predicated region
    $region34: #{tpu_custom_call.1} parent=1 // pred_check
      _
    $region35: #{tpu_custom_call.1} parent=1 // pred_check_branch
      %85 = sbr.rel (0) target = $region37
    $region36: #{tpu_custom_call.1} parent=1 // pred_region
      %87 = dma.done [#allocation6], 384
    $region37: #{tpu_custom_call.1} parent=1 // pred_fallthru
      _
    // Predicated region
    $region38: #{tpu_custom_call.1} parent=1 // pred_check
      _
    $region39: #{tpu_custom_call.1} parent=1 // pred_check_branch
      %89 = sbr.rel (0) target = $region41
    $region40: #{tpu_custom_call.1} parent=1 // pred_region
      %91 = dma.done [#allocation9], 1024
    $region41: #{tpu_custom_call.1} parent=1 // pred_fallthru
      _
    // Predicated region
    $region42: #{tpu_custom_call.1} parent=1 // pred_check
      _
    $region43: #{tpu_custom_call.1} parent=1 // pred_check_branch
      %93 = sbr.rel (0) target = $region45
    $region44: #{tpu_custom_call.1} parent=1 // pred_region
      %95 = dma.done [#allocation9], 32
    $region45: #{tpu_custom_call.1} parent=1 // pred_fallthru
      _
    %v96 = vld [vmem:[#allocation2] sm:$0xff]
    %v97 = vld [vmem:[#allocation5] sm:$0xff]
    %v98 = vld [vmem:[%s5] sm:$0x7]
    %v99 = vld [vmem:[#allocation7] sm:$0xff]
    %v100 = vld [vmem:[#allocation7 + $0x8] sm:$0xff]
    %v101 = vld [vmem:[#allocation7 + $0x10] sm:$0xff]
    %vm102 = vcmask 130048
    %v104 = vsel %vm102, %v97, 0
    %106 = vmatpush.msra.mxu0 0.0
    %107 = vmatpush.msra.mxu0 0.0
    %108 = vmatpush.msra.mxu0 0.0
    %109 = vmatpush.msra.mxu0 0.0
    %110 = vmatpush.msra.mxu0 0.0
    %111 = vmatpush.msra.mxu0 0.0
    %112 = vmatpush.msra.mxu0 0.0
    %113 = vmatpush.msra.mxu0 0.0
    %114 = vmatpush.msra.mxu0 0.0
    %115 = vmatpush.msra.mxu0 0.0
    %116 = vmatpush.msra.mxu0 0.0
    %117 = vmatpush.msra.mxu0 0.0
    %118 = vmatpush.msra.mxu0 0.0
    %119 = vmatpush.msra.mxu0 0.0
    %120 = vmatpush.msra.mxu0 %v101
    %121 = vmatpush.msra.mxu0 %v100
    %122 = vmatmul.f32.gmra.mxu0 %v104
    %v123 = vpop.f32.mrf.mxu0
    %v124 = vadd.f32 0.0, %v123
    %125 = vdwg.mxu0
    %vm126 = vcmask 64512
    %v128 = vsel %vm126, %v96, 0
    %130 = vmatpush.msra.mxu0 0.0
    %131 = vmatpush.msra.mxu0 0.0
    %132 = vmatpush.msra.mxu0 0.0
    %133 = vmatpush.msra.mxu0 0.0
    %134 = vmatpush.msra.mxu0 0.0
    %135 = vmatpush.msra.mxu0 0.0
    %136 = vmatpush.msra.mxu0 0.0
    %137 = vmatpush.msra.mxu0 0.0
    %138 = vmatpush.msra.mxu0 0.0
    %139 = vmatpush.msra.mxu0 0.0
    %140 = vmatpush.msra.mxu0 0.0
    %141 = vmatpush.msra.mxu0 0.0
    %142 = vmatpush.msra.mxu0 0.0
    %143 = vmatpush.msra.mxu0 0.0
    %144 = vmatpush.msra.mxu0 0.0
    %145 = vmatpush.msra.mxu0 %v99
    %146 = vmatmul.f32.gmra.mxu0 %v128
    %v147 = vpop.f32.mrf.mxu0
    %v148 = vadd.f32 %v124, %v147
    %149 = vdwg.mxu0
    %v150 = vperm.slane %v98, 0
    %v151 = vadd.f32 %v148, %v150
    %v152 = vmax.f32 %v151, 0.0
    %v153 = vld [vmem:[#allocation8] sm:$0xff]
    %v154 = vld [vmem:[#allocation8 + $0x8] sm:$0xff]
    %v155 = vld [vmem:[#allocation8 + $0x10] sm:$0xff]
    %v156 = vld [vmem:[#allocation8 + $0x18] sm:$0xff]
    %v157 = vld [vmem:[#allocation8 + $0x20] sm:$0xff]
    %v158 = vld [vmem:[#allocation8 + $0x28] sm:$0xff]
    %v159 = vld [vmem:[#allocation8 + $0x30] sm:$0xff]
    %v160 = vld [vmem:[#allocation8 + $0x38] sm:$0xff]
    %v161 = vperm.slane %v98, 1
    %vm162 = vcmask 523264
    %v164 = vsel %vm162, %v152, 0
    %166 = vmatpush.msra.mxu0 0.0
    %167 = vmatpush.msra.mxu0 0.0
    %168 = vmatpush.msra.mxu0 0.0
    %169 = vmatpush.msra.mxu0 0.0
    %170 = vmatpush.msra.mxu0 0.0
    %171 = vmatpush.msra.mxu0 0.0
    %172 = vmatpush.msra.mxu0 0.0
    %173 = vmatpush.msra.mxu0 0.0
    %174 = vmatpush.msra.mxu0 %v160
    %175 = vmatpush.msra.mxu0 %v159
    %176 = vmatpush.msra.mxu0 %v158
    %177 = vmatpush.msra.mxu0 %v157
    %178 = vmatpush.msra.mxu0 %v156
    %179 = vmatpush.msra.mxu0 %v155
    %180 = vmatpush.msra.mxu0 %v154
    %181 = vmatpush.msra.mxu0 %v153
    %182 = vmatmul.f32.gmra.mxu0 %v164
    %v183 = vpop.f32.mrf.mxu0
    %v184 = vadd.f32 %v161, %v183
    %185 = vdwg.mxu0
    %v186 = vmax.f32 %v184, 0.0
    %v187 = vld [vmem:[#allocation10] sm:$0x3]
    %v188 = vperm.slane %v187, 0
    %v189 = vmul.f32 %v186, %v188
    %v190 = vsel %vm162, %v189, 0.0
    %191 = vadd.xlane.f32.xlu0 %v190
    %v192 = vpop.xlane.xlu0 %191
    %v193 = vperm.slane %v98, 2
    %v194 = vadd.f32 %v192, %v193
    %v195 = vperm.slane %v187, 1
    %v196 = vmul.f32 %v186, %v195
    %v197 = vsel %vm162, %v196, 0.0
    %198 = vadd.xlane.f32.xlu0 %v197
    %v199 = vpop.xlane.xlu0 %198
    %v200 = vadd.f32 %v199, %v193
    %202 = vrot.lane.b32.xlu0 %v200, 127
    %v203 = vpop.permute.xlu0 %202
    %v205 = vmin.f32 %v194, %v203
    %207 = vset.pattern.permute.xlu0 0
    %208 = vperm.xlu0 %207, %v205
    %v209 = vpop.permute.xlu0 %208
    %211 = vst [vmem:[#allocation11] sm:$0xff] %v209
    // Predicated region
    $region46: #{tpu_custom_call.1} parent=1 // pred_check
      _
    $region47: #{tpu_custom_call.1} parent=1 // pred_check_branch
      %213 = sbr.rel (0) target = $region49
    $region48: #{tpu_custom_call.1} parent=1 // pred_region
      %215 = vsyncadd [#allocation4], 0
      %s217 = sshll.u32 [#allocation11], 4
      %s218 = int_to_ptr.vmem [resolvable:$true] %s217
      %s219 = sshll.u32 %s6, 4
      %s220 = int_to_ptr.hbm [resolvable:$true] %s219
      %222 = dma.vmem_to_hbm [thread:$0]  %s218, 128, %s220, [#allocation4]
    $region49: #{tpu_custom_call.1} parent=1 // pred_fallthru
      _
    // Predicated region
    $region50: #{tpu_custom_call.1} parent=1 // pred_check
      _
    $region51: #{tpu_custom_call.1} parent=1 // pred_check_branch
      %224 = sbr.rel (0) target = $region53
    $region52: #{tpu_custom_call.1} parent=1 // pred_region
      %226 = dma.done [#allocation4], 128
    $region53: #{tpu_custom_call.1} parent=1 // pred_fallthru
      _
    %227 = vsyncpa [#allocation3], 1
    %228 = vsyncpa [#allocation6], 1
    %229 = vsyncpa [#allocation9], 1
    %230 = vsyncpa [#allocation4], 1

</llo_original>
